<compile_context>
chip_gen: v7x
topology: tpu7x:2x2x1
jax: 0.10.0
libtpu: 0.0.40
codegen_flags: <defaults>
</compile_context>

<pallas_src>
import jax
import jax.numpy as jnp
from jax.experimental import pallas as pl
from jax.experimental.pallas import tpu as pltpu


def _q_critic_kernel(s_ref, a_ref,
                     w1s_ref, w1a_ref, b1_ref,
                     w2_ref, b2_ref,
                     w3_ref, b3_ref,
                     o_ref):
    # Streamed activations: cast to bf16 at load so the matmuls run the bf16 MXU path;
    # accumulation is f32 (preferred_element_type); bias add / relu stay f32.
    s = s_ref[...].astype(jnp.bfloat16)
    a = a_ref[...].astype(jnp.bfloat16)

    # Layer 1 (both heads at once): relu(sa @ [W1|W4] + [b1|b4]), with the packed weight
    # split into state-rows / action-rows so cat([state, action]) is never built.
    h = (jnp.dot(s, w1s_ref[...], preferred_element_type=jnp.float32)
         + jnp.dot(a, w1a_ref[...], preferred_element_type=jnp.float32)
         + b1_ref[...])
    h = jnp.maximum(h, 0.0)                                   # (tile, 2H) f32

    # Layer 2 (block-diag(w2, w5)): keeps the two heads independent in one matmul.
    h = (jnp.dot(h.astype(jnp.bfloat16), w2_ref[...],
                 preferred_element_type=jnp.float32) + b2_ref[...])
    h = jnp.maximum(h, 0.0)                                   # (tile, 2H) f32

    # Layer 3 (block-diag(w3, w6)): lane 0 = q1, lane 1 = q2.
    q = (jnp.dot(h.astype(jnp.bfloat16), w3_ref[...],
                 preferred_element_type=jnp.float32) + b3_ref[...])
    o_ref[...] = q.astype(o_ref.dtype)                        # (tile, 2)


def q_critic_forward(state, action, params, *, batch_tile=128):
    """Twin-Q forward pass. Returns (q1, q2), each (B, 1) float32.

    state:  (B, state_dim) f32
    action: (B, action_dim) f32
    params: w1 (S+A,H), b1 (1,H), w2 (H,H), b2 (1,H), w3 (H,1), b3 (1,1),
            w4 (S+A,H), b4 (1,H), w5 (H,H), b5 (1,H), w6 (H,1), b6 (1,1)
    """
    B, S = state.shape
    A = action.shape[1]
    H = params["w1"].shape[1]
    assert params["w1"].shape[0] == S + A
    assert batch_tile % 8 == 0, "batch_tile must be a multiple of 8 (f32 sublanes)"

    # Pad the batch up to a tile multiple so any B works; padded rows are sliced off.
    n_tiles = (B + batch_tile - 1) // batch_tile
    Bp = n_tiles * batch_tile
    if Bp != B:
        pad = ((0, Bp - B), (0, 0))
        state = jnp.pad(state, pad)
        action = jnp.pad(action, pad)

    bf16 = jnp.bfloat16
    f32 = jnp.float32

    # ---- Pack the twin heads (done once; hoisted by XLA when params are constant) ----
    # Layer 1: [w1 | w4]  -> (S+A, 2H), split into state / action row blocks.
    w1cat = jnp.concatenate([params["w1"], params["w4"]], axis=1).astype(bf16)
    w1s, w1a = w1cat[:S], w1cat[S:]
    b1cat = jnp.concatenate([params["b1"], params["b4"]], axis=1).astype(f32)  # (1, 2H)
    # Layer 2: block-diag(w2, w5) -> (2H, 2H).
    zHH = jnp.zeros((H, H), f32)
    w2bd = jnp.concatenate(
        [jnp.concatenate([params["w2"], zHH], axis=1),
         jnp.concatenate([zHH, params["w5"]], axis=1)], axis=0).astype(bf16)
    b2cat = jnp.concatenate([params["b2"], params["b5"]], axis=1).astype(f32)  # (1, 2H)
    # Layer 3: block-diag(w3, w6) -> (2H, 2);  col 0 = q1 head, col 1 = q2 head.
    zH1 = jnp.zeros((H, 1), f32)
    w3bd = jnp.concatenate(
        [jnp.concatenate([params["w3"], zH1], axis=1),
         jnp.concatenate([zH1, params["w6"]], axis=1)], axis=0).astype(bf16)
    b3cat = jnp.concatenate([params["b3"], params["b6"]], axis=1).astype(f32)  # (1, 2)

    H2 = 2 * H

    def const(i):  # weight / bias blocks stay VMEM-resident across grid steps
        return (0, 0)

    in_specs = [
        pl.BlockSpec((batch_tile, S), lambda i: (i, 0)),   # state  (streamed)
        pl.BlockSpec((batch_tile, A), lambda i: (i, 0)),   # action (streamed)
        pl.BlockSpec((S, H2), const),                      # W1 state rows  (both heads)
        pl.BlockSpec((A, H2), const),                      # W1 action rows (both heads)
        pl.BlockSpec((1, H2), const),                      # b1 | b4
        pl.BlockSpec((H2, H2), const),                     # block-diag(w2, w5)
        pl.BlockSpec((1, H2), const),                      # b2 | b5
        pl.BlockSpec((H2, 2), const),                      # block-diag(w3, w6)
        pl.BlockSpec((1, 2), const),                       # b3 | b6
    ]

    # Advisory cost estimate for XLA's scheduler.
    flops = 2 * Bp * ((S + A) * H2 + H2 * H2 + H2 * 2)
    weight_bytes = 2 * ((S + A) * H2 + H2 * H2 + H2 * 2)      # bf16 packed weights
    bias_bytes = 4 * (H2 + H2 + 2)                            # f32 packed biases
    bytes_accessed = 4 * Bp * (S + A + 2) + weight_bytes + bias_bytes

    out = pl.pallas_call(
        _q_critic_kernel,
        out_shape=jax.ShapeDtypeStruct((Bp, 2), jnp.float32),
        grid_spec=pltpu.PrefetchScalarGridSpec(
            num_scalar_prefetch=0,
            grid=(n_tiles,),
            in_specs=in_specs,
            out_specs=pl.BlockSpec((batch_tile, 2), lambda i: (i, 0)),
        ),
        compiler_params=pltpu.CompilerParams(
            dimension_semantics=("parallel",),
        ),
        cost_estimate=pl.CostEstimate(
            flops=flops, transcendentals=0, bytes_accessed=bytes_accessed),
    )(state, action, w1s, w1a, b1cat, w2bd, b2cat, w3bd, b3cat)

    q1 = out[:B, 0:1]
    q2 = out[:B, 1:2]
    return q1, q2


def q_critic_Q1(state, action, params, *, batch_tile=128):
    """Equivalent of the PyTorch module's Q1() method."""
    q1, _ = q_critic_forward(state, action, params, batch_tile=batch_tile)
    return q1


def init_q_critic_params(key, state_dim, action_dim, net_width):
    """Deterministic init mimicking PyTorch nn.Linear default U[-1/sqrt(fan_in), +]."""
    def linear(k, fan_in, fan_out):
        kw, kb = jax.random.split(k)
        bound = 1.0 / jnp.sqrt(jnp.float32(fan_in))
        w = jax.random.uniform(kw, (fan_in, fan_out), jnp.float32, -bound, bound)
        b = jax.random.uniform(kb, (1, fan_out), jnp.float32, -bound, bound)
        return w, b

    keys = jax.random.split(key, 6)
    sa = state_dim + action_dim
    w1, b1 = linear(keys[0], sa, net_width)
    w2, b2 = linear(keys[1], net_width, net_width)
    w3, b3 = linear(keys[2], net_width, 1)
    w4, b4 = linear(keys[3], sa, net_width)
    w5, b5 = linear(keys[4], net_width, net_width)
    w6, b6 = linear(keys[5], net_width, 1)
    return dict(w1=w1, b1=b1, w2=w2, b2=b2, w3=w3, b3=b3,
                w4=w4, b4=b4, w5=w5, b5=b5, w6=w6, b6=b6)


def q_critic_reference(state, action, params):
    sa = jnp.concatenate([state, action], axis=1)

    def head(w1, b1, w2, b2, w3, b3):
        h = jax.nn.relu(sa @ w1 + b1)
        h = jax.nn.relu(h @ w2 + b2)
        return h @ w3 + b3

    q1 = head(params["w1"], params["b1"], params["w2"], params["b2"],
              params["w3"], params["b3"])
    q2 = head(params["w4"], params["b4"], params["w5"], params["b5"],
              params["w6"], params["b6"])
    return q1, q2


if __name__ == "__main__":
    # Small shapes consistent with Q_Critic; batch intentionally not a tile multiple
    # to exercise the padding path (padded to 256 -> grid of 2 x 128-row tiles).
    batch = 200
    state_dim = 16
    action_dim = 4
    net_width = 32

    key = jax.random.PRNGKey(0)
    kp, ks, ka = jax.random.split(key, 3)
    params = init_q_critic_params(kp, state_dim, action_dim, net_width)
    state = jax.random.normal(ks, (batch, state_dim), jnp.float32)
    action = jax.random.normal(ka, (batch, action_dim), jnp.float32)

    q1, q2 = q_critic_forward(state, action, params)
    q1 = jax.block_until_ready(q1)
    q2 = jax.block_until_ready(q2)

    r1, r2 = q_critic_reference(state, action, params)
    assert q1.shape == (batch, 1) and q2.shape == (batch, 1)
    # Kernel uses bf16 MXU operands (f32 accumulation); compare to the f32 reference
    # with a correspondingly loose tolerance.
    assert jnp.allclose(q1, r1, atol=3e-2, rtol=3e-2), "q1 mismatch vs reference"
    assert jnp.allclose(q2, r2, atol=3e-2, rtol=3e-2), "q2 mismatch vs reference"

    # Also exercise the Q1-only path.
    q1_only = jax.block_until_ready(q_critic_Q1(state, action, params))
    assert jnp.allclose(q1_only, r1, atol=3e-2, rtol=3e-2), "Q1 mismatch vs reference"

    print("KERNEL_OK")
</pallas_src>

<mosaic_0001>
module attributes {stable_mosaic.version = 11 : i64} {
  func.func @_q_critic_kernel(%arg0: i32, %arg1: memref<128x16xf32, #tpu.memory_space<vmem>>, %arg2: memref<128x4xf32, #tpu.memory_space<vmem>>, %arg3: memref<16x64xbf16, #tpu.memory_space<vmem>>, %arg4: memref<4x64xbf16, #tpu.memory_space<vmem>>, %arg5: memref<1x64xf32, #tpu.memory_space<vmem>>, %arg6: memref<64x64xbf16, #tpu.memory_space<vmem>>, %arg7: memref<1x64xf32, #tpu.memory_space<vmem>>, %arg8: memref<64x2xbf16, #tpu.memory_space<vmem>>, %arg9: memref<1x2xf32, #tpu.memory_space<vmem>>, %arg10: memref<128x2xf32, #tpu.memory_space<vmem>>) attributes {dimension_semantics = [#tpu.dimension_semantics<parallel>], iteration_bounds = array<i64: 2>, scalar_prefetch = 0 : i64, scratch_operands = 0 : i64, tpu.core_type = #tpu.core_type<tc>, window_params = [{transform_indices = @transform_0, window_bounds = array<i64: 128, 16>}, {transform_indices = @transform_1, window_bounds = array<i64: 128, 4>}, {pipeline_mode = #tpu.pipeline_mode<synchronous>, transform_indices = @transform_2, window_bounds = array<i64: 16, 64>}, {pipeline_mode = #tpu.pipeline_mode<synchronous>, transform_indices = @transform_3, window_bounds = array<i64: 4, 64>}, {pipeline_mode = #tpu.pipeline_mode<synchronous>, transform_indices = @transform_4, window_bounds = array<i64: 1, 64>}, {pipeline_mode = #tpu.pipeline_mode<synchronous>, transform_indices = @transform_5, window_bounds = array<i64: 64, 64>}, {pipeline_mode = #tpu.pipeline_mode<synchronous>, transform_indices = @transform_6, window_bounds = array<i64: 1, 64>}, {pipeline_mode = #tpu.pipeline_mode<synchronous>, transform_indices = @transform_7, window_bounds = array<i64: 64, 2>}, {pipeline_mode = #tpu.pipeline_mode<synchronous>, transform_indices = @transform_8, window_bounds = array<i64: 1, 2>}, {transform_indices = @transform_9, window_bounds = array<i64: 128, 2>}]} {
    %c0 = arith.constant 0 : index
    %c0_0 = arith.constant 0 : index
    %0 = vector.load %arg1[%c0, %c0_0] : memref<128x16xf32, #tpu.memory_space<vmem>>, vector<128x16xf32>
    %1 = arith.truncf %0 : vector<128x16xf32> to vector<128x16xbf16>
    %c0_1 = arith.constant 0 : index
    %c0_2 = arith.constant 0 : index
    %2 = vector.load %arg2[%c0_1, %c0_2] : memref<128x4xf32, #tpu.memory_space<vmem>>, vector<128x4xf32>
    %3 = arith.truncf %2 : vector<128x4xf32> to vector<128x4xbf16>
    %c0_3 = arith.constant 0 : index
    %c0_4 = arith.constant 0 : index
    %4 = vector.load %arg3[%c0_3, %c0_4] : memref<16x64xbf16, #tpu.memory_space<vmem>>, vector<16x64xbf16>
    %cst = arith.constant dense<0.000000e+00> : vector<128x64xf32>
    %5 = tpu.matmul %1, %4, %cst {dimension_numbers = #tpu.dot_dimension_numbers<[1], [0], [0], [1], [0, 0, 1, 1], [], []>} : vector<128x16xbf16>, vector<16x64xbf16>, vector<128x64xf32> -> vector<128x64xf32>
    %c0_5 = arith.constant 0 : index
    %c0_6 = arith.constant 0 : index
    %6 = vector.load %arg4[%c0_5, %c0_6] : memref<4x64xbf16, #tpu.memory_space<vmem>>, vector<4x64xbf16>
    %cst_7 = arith.constant dense<0.000000e+00> : vector<128x64xf32>
    %7 = tpu.matmul %3, %6, %cst_7 {dimension_numbers = #tpu.dot_dimension_numbers<[1], [0], [0], [1], [0, 0, 1, 1], [], []>} : vector<128x4xbf16>, vector<4x64xbf16>, vector<128x64xf32> -> vector<128x64xf32>
    %8 = arith.addf %5, %7 : vector<128x64xf32>
    %c0_8 = arith.constant 0 : index
    %c0_9 = arith.constant 0 : index
    %9 = vector.load %arg5[%c0_8, %c0_9] : memref<1x64xf32, #tpu.memory_space<vmem>>, vector<1x64xf32>
    %10 = vector.broadcast %9 : vector<1x64xf32> to vector<128x64xf32>
    %11 = arith.addf %8, %10 : vector<128x64xf32>
    %cst_10 = arith.constant 0.000000e+00 : f32
    %12 = vector.broadcast %cst_10 : f32 to vector<128x64xf32>
    %13 = arith.maximumf %11, %12 : vector<128x64xf32>
    %14 = arith.truncf %13 : vector<128x64xf32> to vector<128x64xbf16>
    %c0_11 = arith.constant 0 : index
    %c0_12 = arith.constant 0 : index
    %15 = vector.load %arg6[%c0_11, %c0_12] : memref<64x64xbf16, #tpu.memory_space<vmem>>, vector<64x64xbf16>
    %cst_13 = arith.constant dense<0.000000e+00> : vector<128x64xf32>
    %16 = tpu.matmul %14, %15, %cst_13 {dimension_numbers = #tpu.dot_dimension_numbers<[1], [0], [0], [1], [0, 0, 1, 1], [], []>} : vector<128x64xbf16>, vector<64x64xbf16>, vector<128x64xf32> -> vector<128x64xf32>
    %c0_14 = arith.constant 0 : index
    %c0_15 = arith.constant 0 : index
    %17 = vector.load %arg7[%c0_14, %c0_15] : memref<1x64xf32, #tpu.memory_space<vmem>>, vector<1x64xf32>
    %18 = vector.broadcast %17 : vector<1x64xf32> to vector<128x64xf32>
    %19 = arith.addf %16, %18 : vector<128x64xf32>
    %cst_16 = arith.constant 0.000000e+00 : f32
    %20 = vector.broadcast %cst_16 : f32 to vector<128x64xf32>
    %21 = arith.maximumf %19, %20 : vector<128x64xf32>
    %22 = arith.truncf %21 : vector<128x64xf32> to vector<128x64xbf16>
    %c0_17 = arith.constant 0 : index
    %c0_18 = arith.constant 0 : index
    %23 = vector.load %arg8[%c0_17, %c0_18] : memref<64x2xbf16, #tpu.memory_space<vmem>>, vector<64x2xbf16>
    %cst_19 = arith.constant dense<0.000000e+00> : vector<128x2xf32>
    %24 = tpu.matmul %22, %23, %cst_19 {dimension_numbers = #tpu.dot_dimension_numbers<[1], [0], [0], [1], [0, 0, 1, 1], [], []>} : vector<128x64xbf16>, vector<64x2xbf16>, vector<128x2xf32> -> vector<128x2xf32>
    %c0_20 = arith.constant 0 : index
    %c0_21 = arith.constant 0 : index
    %25 = vector.load %arg9[%c0_20, %c0_21] : memref<1x2xf32, #tpu.memory_space<vmem>>, vector<1x2xf32>
    %26 = vector.broadcast %25 : vector<1x2xf32> to vector<128x2xf32>
    %27 = arith.addf %24, %26 : vector<128x2xf32>
    %c0_22 = arith.constant 0 : index
    %c0_23 = arith.constant 0 : index
    %28 = vector.load %arg10[%c0_22, %c0_23] : memref<128x2xf32, #tpu.memory_space<vmem>>, vector<128x2xf32>
    tpu.vector_store %arg10[%c0_22, %c0_23], %27 {strides = array<i32>} : memref<128x2xf32, #tpu.memory_space<vmem>>, vector<128x2xf32>,
    return
  }
  func.func @transform_0(%arg0: i32) -> (i32, i32) {
    %c0_i32 = arith.constant 0 : i32
    %c0_i32_0 = arith.constant 0 : i32
    return %arg0, %c0_i32 : i32, i32
  }
  func.func @transform_1(%arg0: i32) -> (i32, i32) {
    %c0_i32 = arith.constant 0 : i32
    %c0_i32_0 = arith.constant 0 : i32
    return %arg0, %c0_i32 : i32, i32
  }
  func.func @transform_2(%arg0: i32) -> (i32, i32) {
    %c0_i32 = arith.constant 0 : i32
    %c0_i32_0 = arith.constant 0 : i32
    %c0_i32_1 = arith.constant 0 : i32
    return %c0_i32, %c0_i32_0 : i32, i32
  }
  func.func @transform_3(%arg0: i32) -> (i32, i32) {
    %c0_i32 = arith.constant 0 : i32
    %c0_i32_0 = arith.constant 0 : i32
    %c0_i32_1 = arith.constant 0 : i32
    return %c0_i32, %c0_i32_0 : i32, i32
  }
  func.func @transform_4(%arg0: i32) -> (i32, i32) {
    %c0_i32 = arith.constant 0 : i32
    %c0_i32_0 = arith.constant 0 : i32
    %c0_i32_1 = arith.constant 0 : i32
    return %c0_i32, %c0_i32_0 : i32, i32
  }
  func.func @transform_5(%arg0: i32) -> (i32, i32) {
    %c0_i32 = arith.constant 0 : i32
    %c0_i32_0 = arith.constant 0 : i32
    %c0_i32_1 = arith.constant 0 : i32
    return %c0_i32, %c0_i32_0 : i32, i32
  }
  func.func @transform_6(%arg0: i32) -> (i32, i32) {
    %c0_i32 = arith.constant 0 : i32
    %c0_i32_0 = arith.constant 0 : i32
    %c0_i32_1 = arith.constant 0 : i32
    return %c0_i32, %c0_i32_0 : i32, i32
  }
  func.func @transform_7(%arg0: i32) -> (i32, i32) {
    %c0_i32 = arith.constant 0 : i32
    %c0_i32_0 = arith.constant 0 : i32
    %c0_i32_1 = arith.constant 0 : i32
    return %c0_i32, %c0_i32_0 : i32, i32
  }
  func.func @transform_8(%arg0: i32) -> (i32, i32) {
    %c0_i32 = arith.constant 0 : i32
    %c0_i32_0 = arith.constant 0 : i32
    %c0_i32_1 = arith.constant 0 : i32
    return %c0_i32, %c0_i32_0 : i32, i32
  }
  func.func @transform_9(%arg0: i32) -> (i32, i32) {
    %c0_i32 = arith.constant 0 : i32
    %c0_i32_0 = arith.constant 0 : i32
    return %arg0, %c0_i32 : i32, i32
  }
}

</mosaic_0001>

<llo_original>
// kernel: tpu_custom_call.1
$region0: #{tpu_custom_call.1}
  #allocation0 [shape = 'u32[]', space=smem, size = 0x4, offset = 0x4, fixed_abs, tag = 'smem constant byte address 0x4 - core index']
  #allocation1 [shape = 'u32[144,128]{1,0:T(1,128)}', space=vmem, size = 0x12000, scoped, tag = 'internal scratch']
  %s0 = inlined_call_operand.vmem [shape: f32[256,16], index: 0, kind: input, shape index: {}]
  %s1 = inlined_call_operand.vmem [shape: f32[256,4], index: 1, kind: input, shape index: {}]
  %s2 = inlined_call_operand.vmem [shape: bf16[16,64], index: 2, kind: input, shape index: {}]
  %s3 = inlined_call_operand.vmem [shape: bf16[4,64], index: 3, kind: input, shape index: {}]
  %s4 = inlined_call_operand.vmem [shape: f32[1,64], index: 4, kind: input, shape index: {}]
  %s5 = inlined_call_operand.vmem [shape: bf16[64,64], index: 5, kind: input, shape index: {}]
  %s6 = inlined_call_operand.vmem [shape: f32[1,64], index: 6, kind: input, shape index: {}]
  %s7 = inlined_call_operand.vmem [shape: bf16[64,2], index: 7, kind: input, shape index: {}]
  %s8 = inlined_call_operand.vmem [shape: f32[1,2], index: 8, kind: input, shape index: {}]
  %s9 = inlined_call_operand.vmem [shape: f32[256,2], index: 9, kind: output, shape index: {}]
  %s10 = sld [smem:[#allocation0]]
  $region69: #{tpu_custom_call.1} parent=0
    _
  %s12 = ssub.s32 1, %s10
  %s13 = scalar_select 0, %s12, %s10
  loop: start=0, step=1, limit=4
  $region2: #{tpu_custom_call.1} parent=0 // loop_pre_header
    _
  $region3: #{tpu_custom_call.1} parent=0 // loop_header
    %s15 = sphi 0, %s19
    %p16 = scmp.ge.s32.totalorder %s15, 4
    %s25 = sphi 0, %s27
    %s28 = sphi 0, %s25
    %s29 = sphi 0, %s28
    %s45 = sphi 0, %s29
    %s51 = sphi 0, %s53
    %s54 = sphi 0, %s51
    %s55 = sphi 0, %s54
    %s71 = sphi 0, %s55
    %s75 = sphi 0, %s75
    %s77 = sphi 0, %s75
    %s78 = sphi 0, %s77
    %s92 = sphi 0, %s78
    %s96 = sphi 0, %s96
    %s98 = sphi 0, %s96
    %s99 = sphi 0, %s98
    %s113 = sphi 0, %s99
    %s117 = sphi 0, %s117
    %s119 = sphi 0, %s117
    %s120 = sphi 0, %s119
    %s134 = sphi 0, %s120
    %s138 = sphi 0, %s138
    %s140 = sphi 0, %s138
    %s141 = sphi 0, %s140
    %s155 = sphi 0, %s141
    %s159 = sphi 0, %s159
    %s161 = sphi 0, %s159
    %s162 = sphi 0, %s161
    %s176 = sphi 0, %s162
    %s180 = sphi 0, %s180
    %s182 = sphi 0, %s180
    %s183 = sphi 0, %s182
    %s197 = sphi 0, %s183
    %s201 = sphi 0, %s201
    %s203 = sphi 0, %s201
    %s204 = sphi 0, %s203
    %s218 = sphi 0, %s204
    %s224 = sphi 0, %s226
    %s227 = sphi 0, %s224
    %s228 = sphi 0, %s227
    %s244 = sphi 0, %s228
  $region4: #{tpu_custom_call.1} parent=0 // loop_header_branch
    %18 = sbr.rel (%p16) target = $region8
  $region5: #{tpu_custom_call.1} parent=0 // loop_body
    %s20 = ssub.s32 %s15, 1
    %s21 = ssub.s32 %s15, 2
    %s22 = sadd.s32 %s15, 1
    %s23 = ssub.s32 %s15, %s22
    %p24 = scmp.eq.s32.totalorder %s23, 0
    %s26 = sadd.s32 %s25, 1
    %s27 = scalar_select %p24, %s25, %s26
    %p30 = pneg %p24
    %p31 = scmp.eq.s32.totalorder %s15, 1
    %p32 = por %p30, %p31
    %p33 = scmp.ne.s32.totalorder %s25, %s28
    %p34 = scmp.eq.s32.totalorder %s15, 0
    %p35 = por %p33, %p34
    %p36 = scmp.ne.s32.totalorder %s25, %s28
    %p37 = scmp.eq.s32.totalorder %s20, 1
    %p38 = por %p36, %p37
    %p39 = scmp.ne.s32.totalorder %s28, %s29
    %p40 = scmp.eq.s32.totalorder %s20, 0
    %p41 = por %p39, %p40
    %p42 = scmp.ne.s32.totalorder %s28, %s29
    %p43 = scmp.eq.s32.totalorder %s21, 1
    %p44 = por %p42, %p43
    %p46 = scmp.ne.s32.totalorder %s29, %s45
    %p47 = scmp.eq.s32.totalorder %s21, 0
    %p48 = por %p46, %p47
    %s49 = ssub.s32 %s15, %s22
    %p50 = scmp.eq.s32.totalorder %s49, 0
    %s52 = sadd.s32 %s51, 1
    %s53 = scalar_select %p50, %s51, %s52
    %p56 = pneg %p50
    %p57 = scmp.eq.s32.totalorder %s15, 1
    %p58 = por %p56, %p57
    %p59 = scmp.ne.s32.totalorder %s51, %s54
    %p60 = scmp.eq.s32.totalorder %s15, 0
    %p61 = por %p59, %p60
    %p62 = scmp.ne.s32.totalorder %s51, %s54
    %p63 = scmp.eq.s32.totalorder %s20, 1
    %p64 = por %p62, %p63
    %p65 = scmp.ne.s32.totalorder %s54, %s55
    %p66 = scmp.eq.s32.totalorder %s20, 0
    %p67 = por %p65, %p66
    %p68 = scmp.ne.s32.totalorder %s54, %s55
    %p69 = scmp.eq.s32.totalorder %s21, 1
    %p70 = por %p68, %p69
    %p72 = scmp.ne.s32.totalorder %s55, %s71
    %p73 = scmp.eq.s32.totalorder %s21, 0
    %p74 = por %p72, %p73
    %s76 = sadd.s32 %s75, 1
    %p79 = scmp.eq.s32.totalorder %s15, 1
    %p80 = scmp.ne.s32.totalorder %s75, %s77
    %p81 = scmp.eq.s32.totalorder %s15, 0
    %p82 = por %p80, %p81
    %p83 = scmp.ne.s32.totalorder %s75, %s77
    %p84 = scmp.eq.s32.totalorder %s20, 1
    %p85 = por %p83, %p84
    %p86 = scmp.ne.s32.totalorder %s77, %s78
    %p87 = scmp.eq.s32.totalorder %s20, 0
    %p88 = por %p86, %p87
    %p89 = scmp.ne.s32.totalorder %s77, %s78
    %p90 = scmp.eq.s32.totalorder %s21, 1
    %p91 = por %p89, %p90
    %p93 = scmp.ne.s32.totalorder %s78, %s92
    %p94 = scmp.eq.s32.totalorder %s21, 0
    %p95 = por %p93, %p94
    %s97 = sadd.s32 %s96, 1
    %p100 = scmp.eq.s32.totalorder %s15, 1
    %p101 = scmp.ne.s32.totalorder %s96, %s98
    %p102 = scmp.eq.s32.totalorder %s15, 0
    %p103 = por %p101, %p102
    %p104 = scmp.ne.s32.totalorder %s96, %s98
    %p105 = scmp.eq.s32.totalorder %s20, 1
    %p106 = por %p104, %p105
    %p107 = scmp.ne.s32.totalorder %s98, %s99
    %p108 = scmp.eq.s32.totalorder %s20, 0
    %p109 = por %p107, %p108
    %p110 = scmp.ne.s32.totalorder %s98, %s99
    %p111 = scmp.eq.s32.totalorder %s21, 1
    %p112 = por %p110, %p111
    %p114 = scmp.ne.s32.totalorder %s99, %s113
    %p115 = scmp.eq.s32.totalorder %s21, 0
    %p116 = por %p114, %p115
    %s118 = sadd.s32 %s117, 1
    %p121 = scmp.eq.s32.totalorder %s15, 1
    %p122 = scmp.ne.s32.totalorder %s117, %s119
    %p123 = scmp.eq.s32.totalorder %s15, 0
    %p124 = por %p122, %p123
    %p125 = scmp.ne.s32.totalorder %s117, %s119
    %p126 = scmp.eq.s32.totalorder %s20, 1
    %p127 = por %p125, %p126
    %p128 = scmp.ne.s32.totalorder %s119, %s120
    %p129 = scmp.eq.s32.totalorder %s20, 0
    %p130 = por %p128, %p129
    %p131 = scmp.ne.s32.totalorder %s119, %s120
    %p132 = scmp.eq.s32.totalorder %s21, 1
    %p133 = por %p131, %p132
    %p135 = scmp.ne.s32.totalorder %s120, %s134
    %p136 = scmp.eq.s32.totalorder %s21, 0
    %p137 = por %p135, %p136
    %s139 = sadd.s32 %s138, 1
    %p142 = scmp.eq.s32.totalorder %s15, 1
    %p143 = scmp.ne.s32.totalorder %s138, %s140
    %p144 = scmp.eq.s32.totalorder %s15, 0
    %p145 = por %p143, %p144
    %p146 = scmp.ne.s32.totalorder %s138, %s140
    %p147 = scmp.eq.s32.totalorder %s20, 1
    %p148 = por %p146, %p147
    %p149 = scmp.ne.s32.totalorder %s140, %s141
    %p150 = scmp.eq.s32.totalorder %s20, 0
    %p151 = por %p149, %p150
    %p152 = scmp.ne.s32.totalorder %s140, %s141
    %p153 = scmp.eq.s32.totalorder %s21, 1
    %p154 = por %p152, %p153
    %p156 = scmp.ne.s32.totalorder %s141, %s155
    %p157 = scmp.eq.s32.totalorder %s21, 0
    %p158 = por %p156, %p157
    %s160 = sadd.s32 %s159, 1
    %p163 = scmp.eq.s32.totalorder %s15, 1
    %p164 = scmp.ne.s32.totalorder %s159, %s161
    %p165 = scmp.eq.s32.totalorder %s15, 0
    %p166 = por %p164, %p165
    %p167 = scmp.ne.s32.totalorder %s159, %s161
    %p168 = scmp.eq.s32.totalorder %s20, 1
    %p169 = por %p167, %p168
    %p170 = scmp.ne.s32.totalorder %s161, %s162
    %p171 = scmp.eq.s32.totalorder %s20, 0
    %p172 = por %p170, %p171
    %p173 = scmp.ne.s32.totalorder %s161, %s162
    %p174 = scmp.eq.s32.totalorder %s21, 1
    %p175 = por %p173, %p174
    %p177 = scmp.ne.s32.totalorder %s162, %s176
    %p178 = scmp.eq.s32.totalorder %s21, 0
    %p179 = por %p177, %p178
    %s181 = sadd.s32 %s180, 1
    %p184 = scmp.eq.s32.totalorder %s15, 1
    %p185 = scmp.ne.s32.totalorder %s180, %s182
    %p186 = scmp.eq.s32.totalorder %s15, 0
    %p187 = por %p185, %p186
    %p188 = scmp.ne.s32.totalorder %s180, %s182
    %p189 = scmp.eq.s32.totalorder %s20, 1
    %p190 = por %p188, %p189
    %p191 = scmp.ne.s32.totalorder %s182, %s183
    %p192 = scmp.eq.s32.totalorder %s20, 0
    %p193 = por %p191, %p192
    %p194 = scmp.ne.s32.totalorder %s182, %s183
    %p195 = scmp.eq.s32.totalorder %s21, 1
    %p196 = por %p194, %p195
    %p198 = scmp.ne.s32.totalorder %s183, %s197
    %p199 = scmp.eq.s32.totalorder %s21, 0
    %p200 = por %p198, %p199
    %s202 = sadd.s32 %s201, 1
    %p205 = scmp.eq.s32.totalorder %s15, 1
    %p206 = scmp.ne.s32.totalorder %s201, %s203
    %p207 = scmp.eq.s32.totalorder %s15, 0
    %p208 = por %p206, %p207
    %p209 = scmp.ne.s32.totalorder %s201, %s203
    %p210 = scmp.eq.s32.totalorder %s20, 1
    %p211 = por %p209, %p210
    %p212 = scmp.ne.s32.totalorder %s203, %s204
    %p213 = scmp.eq.s32.totalorder %s20, 0
    %p214 = por %p212, %p213
    %p215 = scmp.ne.s32.totalorder %s203, %s204
    %p216 = scmp.eq.s32.totalorder %s21, 1
    %p217 = por %p215, %p216
    %p219 = scmp.ne.s32.totalorder %s204, %s218
    %p220 = scmp.eq.s32.totalorder %s21, 0
    %p221 = por %p219, %p220
    %s222 = ssub.s32 %s15, %s22
    %p223 = scmp.eq.s32.totalorder %s222, 0
    %s225 = sadd.s32 %s224, 1
    %s226 = scalar_select %p223, %s224, %s225
    %p229 = pneg %p223
    %p230 = scmp.eq.s32.totalorder %s15, 1
    %p231 = por %p229, %p230
    %p232 = scmp.ne.s32.totalorder %s224, %s227
    %p233 = scmp.eq.s32.totalorder %s15, 0
    %p234 = por %p232, %p233
    %p235 = scmp.ne.s32.totalorder %s224, %s227
    %p236 = scmp.eq.s32.totalorder %s20, 1
    %p237 = por %p235, %p236
    %p238 = scmp.ne.s32.totalorder %s227, %s228
    %p239 = scmp.eq.s32.totalorder %s20, 0
    %p240 = por %p238, %p239
    %p241 = scmp.ne.s32.totalorder %s227, %s228
    %p242 = scmp.eq.s32.totalorder %s21, 1
    %p243 = por %p241, %p242
    %p245 = scmp.ne.s32.totalorder %s228, %s244
    %p246 = scmp.eq.s32.totalorder %s21, 0
    %p247 = por %p245, %p246
    %p248 = scmp.le.s32.totalorder 1, %s15
    %p249 = scmp.lt.s32.totalorder %s15, 3
    %p250 = pnand %p248, %p249
    %p251 = pneg %p250
    // Predicated region
    $region9: #{tpu_custom_call.1} parent=5 // pred_check
      _
    $region10: #{tpu_custom_call.1} parent=5 // pred_check_branch
      %253 = sbr.rel (%p250) target = $region12
    $region11: #{tpu_custom_call.1} parent=5 // pred_region
      %s254 = ssub.s32 %s15, 1
      // Predicated region
      $region13: #{tpu_custom_call.1} parent=11 // pred_check
        %p255 = pneg %p88
      $region14: #{tpu_custom_call.1} parent=11 // pred_check_branch
        %257 = sbr.rel (%p255) target = $region16
      $region15: #{tpu_custom_call.1} parent=11 // pred_region
        _
      $region16: #{tpu_custom_call.1} parent=11 // pred_fallthru
        _
      // Predicated region
      $region17: #{tpu_custom_call.1} parent=11 // pred_check
        %p258 = pneg %p109
      $region18: #{tpu_custom_call.1} parent=11 // pred_check_branch
        %260 = sbr.rel (%p258) target = $region20
      $region19: #{tpu_custom_call.1} parent=11 // pred_region
        _
      $region20: #{tpu_custom_call.1} parent=11 // pred_fallthru
        _
      // Predicated region
      $region21: #{tpu_custom_call.1} parent=11 // pred_check
        %p261 = pneg %p130
      $region22: #{tpu_custom_call.1} parent=11 // pred_check_branch
        %263 = sbr.rel (%p261) target = $region24
      $region23: #{tpu_custom_call.1} parent=11 // pred_region
        _
      $region24: #{tpu_custom_call.1} parent=11 // pred_fallthru
        _
      // Predicated region
      $region25: #{tpu_custom_call.1} parent=11 // pred_check
        %p264 = pneg %p151
      $region26: #{tpu_custom_call.1} parent=11 // pred_check_branch
        %266 = sbr.rel (%p264) target = $region28
      $region27: #{tpu_custom_call.1} parent=11 // pred_region
        _
      $region28: #{tpu_custom_call.1} parent=11 // pred_fallthru
        _
      // Predicated region
      $region29: #{tpu_custom_call.1} parent=11 // pred_check
        %p267 = pneg %p172
      $region30: #{tpu_custom_call.1} parent=11 // pred_check_branch
        %269 = sbr.rel (%p267) target = $region32
      $region31: #{tpu_custom_call.1} parent=11 // pred_region
        _
      $region32: #{tpu_custom_call.1} parent=11 // pred_fallthru
        _
      // Predicated region
      $region33: #{tpu_custom_call.1} parent=11 // pred_check
        %p270 = pneg %p193
      $region34: #{tpu_custom_call.1} parent=11 // pred_check_branch
        %272 = sbr.rel (%p270) target = $region36
      $region35: #{tpu_custom_call.1} parent=11 // pred_region
        _
      $region36: #{tpu_custom_call.1} parent=11 // pred_fallthru
        _
      // Predicated region
      $region37: #{tpu_custom_call.1} parent=11 // pred_check
        %p273 = pneg %p214
      $region38: #{tpu_custom_call.1} parent=11 // pred_check_branch
        %275 = sbr.rel (%p273) target = $region40
      $region39: #{tpu_custom_call.1} parent=11 // pred_region
        _
      $region40: #{tpu_custom_call.1} parent=11 // pred_fallthru
        _
    $region12: #{tpu_custom_call.1} parent=5 // pred_fallthru
      _
    %p276 = scmp.lt.s32.totalorder %s15, 2
    // Predicated region
    $region41: #{tpu_custom_call.1} parent=5 // pred_check
      %p277 = pneg %p276
    $region42: #{tpu_custom_call.1} parent=5 // pred_check_branch
      %279 = sbr.rel (%p277) target = $region44
    $region43: #{tpu_custom_call.1} parent=5 // pred_region
      // Predicated region
      $region45: #{tpu_custom_call.1} parent=43 // pred_check
        %p280 = pneg %p35
      $region46: #{tpu_custom_call.1} parent=43 // pred_check_branch
        %282 = sbr.rel (%p280) target = $region48
      $region47: #{tpu_custom_call.1} parent=43 // pred_region
        %s283 = smul.u32 16, %s15
        %p284 = scmp.lt.s32.totalorder %s283, 31
        %s285 = scalar_select %p284, %s283, 31
        %s286 = smul.addr %s285, 8
        %s287 = scalar_lea.vmem %s0, %s286
        %s288 = smul.u32 16, %s15
      $region48: #{tpu_custom_call.1} parent=43 // pred_fallthru
        _
      // Predicated region
      $region49: #{tpu_custom_call.1} parent=43 // pred_check
        %p289 = pneg %p61
      $region50: #{tpu_custom_call.1} parent=43 // pred_check_branch
        %291 = sbr.rel (%p289) target = $region52
      $region51: #{tpu_custom_call.1} parent=43 // pred_region
        %s292 = smul.u32 16, %s15
        %p293 = scmp.lt.s32.totalorder %s292, 31
        %s294 = scalar_select %p293, %s292, 31
        %s295 = smul.addr %s294, 8
        %s296 = scalar_lea.vmem %s1, %s295
        %s297 = smul.u32 16, %s15
      $region52: #{tpu_custom_call.1} parent=43 // pred_fallthru
        _
    $region44: #{tpu_custom_call.1} parent=5 // pred_fallthru
      _
    %p298 = scmp.le.s32.totalorder 1, %s15
    %p299 = scmp.lt.s32.totalorder %s15, 3
    %p300 = pnand %p298, %p299
    %p301 = pneg %p300
    // Predicated region
    $region53: #{tpu_custom_call.1} parent=5 // pred_check
      _
    $region54: #{tpu_custom_call.1} parent=5 // pred_check_branch
      %303 = sbr.rel (%p300) target = $region56
    $region55: #{tpu_custom_call.1} parent=5 // pred_region
      %s304 = ssub.s32 %s15, 1
      %s305 = smul.u32 16, %s20
      %p306 = scmp.lt.s32.totalorder %s305, 31
      %s307 = scalar_select %p306, %s305, 31
      %s308 = smul.addr %s307, 8
      %s309 = scalar_lea.vmem %s0, %s308
      %p310 = pneg %p41
      %p311 = pneg %p38
      %s312 = smul.u32 16, %s20
      %p313 = scmp.lt.s32.totalorder %s312, 31
      %s314 = scalar_select %p313, %s312, 31
      %s315 = smul.addr %s314, 8
      %s316 = scalar_lea.vmem %s1, %s315
      %p317 = pneg %p67
      %p318 = pneg %p64
      %p319 = pneg %p88
      %p320 = pneg %p85
      %p321 = pneg %p109
      %p322 = pneg %p106
      %p323 = pneg %p130
      %p324 = pneg %p127
      %p325 = pneg %p151
      %p326 = pneg %p148
      %p327 = pneg %p172
      %p328 = pneg %p169
      %p329 = pneg %p193
      %p330 = pneg %p190
      %p331 = pneg %p214
      %p332 = pneg %p211
      %p333 = pneg %p240
      %p334 = pneg %p237
      %s335 = smul.u32 16, %s20
      %p336 = scmp.lt.s32.totalorder %s335, 31
      %s337 = scalar_select %p336, %s335, 31
      %s338 = smul.addr %s337, 8
      %s339 = scalar_lea.vmem %s9, %s338
      %s340 = smul.u32 16, %s20
      %p341 = scmp.lt.s32.totalorder %s340, 31
      %s342 = scalar_select %p341, %s340, 31
      %s343 = smul.addr %s342, 8
      %s344 = scalar_lea.vmem %s0, %s343
      %s345 = smul.u32 16, %s20
      %s346 = smul.u32 16, %s20
      %p347 = scmp.lt.s32.totalorder %s346, 31
      %s348 = scalar_select %p347, %s346, 31
      %s349 = smul.addr %s348, 8
      %s350 = scalar_lea.vmem %s1, %s349
      %s351 = smul.u32 16, %s20
      %s352 = smul.u32 16, %s20
      %p353 = scmp.lt.s32.totalorder %s352, 31
      %s354 = scalar_select %p353, %s352, 31
      %s355 = smul.addr %s354, 8
      %s356 = scalar_lea.vmem %s9, %s355
      %s357 = smul.u32 16, %s20
      %v359 = vld [vmem:[%s344] sm:$0xff]
      %v360 = vld [vmem:[%s344 + $0x8] sm:$0xff]
      %v361 = vld [vmem:[%s344 + $0x10] sm:$0xff]
      %v362 = vld [vmem:[%s344 + $0x18] sm:$0xff]
      %v363 = vld [vmem:[%s344 + $0x20] sm:$0xff]
      %v364 = vld [vmem:[%s344 + $0x28] sm:$0xff]
      %v365 = vld [vmem:[%s344 + $0x30] sm:$0xff]
      %v366 = vld [vmem:[%s344 + $0x38] sm:$0xff]
      %v367 = vld [vmem:[%s344 + $0x40] sm:$0xff]
      %v368 = vld [vmem:[%s344 + $0x48] sm:$0xff]
      %v369 = vld [vmem:[%s344 + $0x50] sm:$0xff]
      %v370 = vld [vmem:[%s344 + $0x58] sm:$0xff]
      %v371 = vld [vmem:[%s344 + $0x60] sm:$0xff]
      %v372 = vld [vmem:[%s344 + $0x68] sm:$0xff]
      %v373 = vld [vmem:[%s344 + $0x70] sm:$0xff]
      %v374 = vld [vmem:[%s344 + $0x78] sm:$0xff]
      %v375 = vpack.c.bf16 %v360, %v359
      %v376 = vpack.c.bf16 %v362, %v361
      %v377 = vpack.c.bf16 %v364, %v363
      %v378 = vpack.c.bf16 %v366, %v365
      %v379 = vpack.c.bf16 %v368, %v367
      %v380 = vpack.c.bf16 %v370, %v369
      %v381 = vpack.c.bf16 %v372, %v371
      %v382 = vpack.c.bf16 %v374, %v373
      %v383 = vld [vmem:[%s350] sm:$0xff]
      %v384 = vld [vmem:[%s350 + $0x8] sm:$0xff]
      %v385 = vld [vmem:[%s350 + $0x10] sm:$0xff]
      %v386 = vld [vmem:[%s350 + $0x18] sm:$0xff]
      %v387 = vld [vmem:[%s350 + $0x20] sm:$0xff]
      %v388 = vld [vmem:[%s350 + $0x28] sm:$0xff]
      %v389 = vld [vmem:[%s350 + $0x30] sm:$0xff]
      %v390 = vld [vmem:[%s350 + $0x38] sm:$0xff]
      %v391 = vld [vmem:[%s350 + $0x40] sm:$0xff]
      %v392 = vld [vmem:[%s350 + $0x48] sm:$0xff]
      %v393 = vld [vmem:[%s350 + $0x50] sm:$0xff]
      %v394 = vld [vmem:[%s350 + $0x58] sm:$0xff]
      %v395 = vld [vmem:[%s350 + $0x60] sm:$0xff]
      %v396 = vld [vmem:[%s350 + $0x68] sm:$0xff]
      %v397 = vld [vmem:[%s350 + $0x70] sm:$0xff]
      %v398 = vld [vmem:[%s350 + $0x78] sm:$0xff]
      %v399 = vpack.c.bf16 %v384, %v383
      %v400 = vpack.c.bf16 %v386, %v385
      %v401 = vpack.c.bf16 %v388, %v387
      %v402 = vpack.c.bf16 %v390, %v389
      %v403 = vpack.c.bf16 %v392, %v391
      %v404 = vpack.c.bf16 %v394, %v393
      %v405 = vpack.c.bf16 %v396, %v395
      %v406 = vpack.c.bf16 %v398, %v397
      %v407 = vld [vmem:[%s2] sm:$0xf]
      %v408 = vld [vmem:[%s2 + $0x4] sm:$0xf]
      %v409 = vld [vmem:[%s3] sm:$0x3]
      %vm410 = vcmask 31744
      %v412 = vsel %vm410, %v399, 0
      %v415 = vsel %vm410, %v400, 0
      %v418 = vsel %vm410, %v401, 0
      %v421 = vsel %vm410, %v402, 0
      %v424 = vsel %vm410, %v403, 0
      %v427 = vsel %vm410, %v404, 0
      %v430 = vsel %vm410, %v405, 0
      %v433 = vsel %vm410, %v406, 0
      %vm435 = vcmask 1041408
      %v437 = vsel %vm435, %v409, 0
      %439 = vmatprep.subr.bf16.mxu0 0
      %440 = vmatpush1.bf16.msra.mxu0 %v437
      %441 = vmatprep.subr.bf16.mxu0 0
      %442 = vmatpush1.bf16.msra.mxu0 0
      %443 = vmatprep.subr.bf16.mxu0 0
      %444 = vmatpush1.bf16.msra.mxu0 0
      %445 = vmatprep.subr.bf16.mxu0 0
      %446 = vmatpush1.bf16.msra.mxu0 0
      %447 = vmatprep.subr.bf16.mxu0 0
      %448 = vmatpush1.bf16.msra.mxu0 0
      %449 = vmatprep.subr.bf16.mxu0 0
      %450 = vmatpush1.bf16.msra.mxu0 0
      %451 = vmatprep.subr.bf16.mxu0 0
      %452 = vmatpush1.bf16.msra.mxu0 0
      %453 = vmatprep.subr.bf16.mxu0 0
      %454 = vmatpush1.bf16.msra.mxu0 0
      %455 = vmatprep.subr.bf16.mxu0 0
      %456 = vmatpush1.bf16.msra.mxu0 0
      %457 = vmatprep.subr.bf16.mxu0 0
      %458 = vmatpush1.bf16.msra.mxu0 0
      %459 = vmatprep.subr.bf16.mxu0 0
      %460 = vmatpush1.bf16.msra.mxu0 0
      %461 = vmatprep.subr.bf16.mxu0 0
      %462 = vmatpush1.bf16.msra.mxu0 0
      %463 = vmatprep.subr.bf16.mxu0 0
      %464 = vmatpush1.bf16.msra.mxu0 0
      %465 = vmatprep.subr.bf16.mxu0 0
      %466 = vmatpush1.bf16.msra.mxu0 0
      %467 = vmatprep.subr.bf16.mxu0 0
      %468 = vmatpush1.bf16.msra.mxu0 0
      %469 = vmatprep.subr.bf16.mxu0 0
      %470 = vmatpush1.bf16.msra.mxu0 0
      %471 = vmatprep.mubr.bf16.mxu0 0
      %472 = vmatmul.mubr.bf16.gmra.mrb[0].mxu0 %v412
      %v473 = vpop.f32.mrb[0].mxu0
      %v474 = vadd.f32 0.0, %v473
      %v475 = vpop.f32.mrb[0].mxu0
      %v476 = vpop.f32.mrb[0].mxu0
      %v477 = vadd.f32 0.0, %v476
      %v478 = vpop.f32.mrb[0].mxu0
      %479 = vmatprep.mubr.bf16.mxu0 0
      %480 = vmatmul.mubr.bf16.gmra.mrb[0].mxu0 %v415
      %v481 = vpop.f32.mrb[0].mxu0
      %v482 = vadd.f32 0.0, %v481
      %v483 = vpop.f32.mrb[0].mxu0
      %v484 = vpop.f32.mrb[0].mxu0
      %v485 = vadd.f32 0.0, %v484
      %v486 = vpop.f32.mrb[0].mxu0
      %487 = vmatprep.mubr.bf16.mxu0 0
      %488 = vmatmul.mubr.bf16.gmra.mrb[0].mxu0 %v418
      %v489 = vpop.f32.mrb[0].mxu0
      %v490 = vadd.f32 0.0, %v489
      %v491 = vpop.f32.mrb[0].mxu0
      %v492 = vpop.f32.mrb[0].mxu0
      %v493 = vadd.f32 0.0, %v492
      %v494 = vpop.f32.mrb[0].mxu0
      %495 = vmatprep.mubr.bf16.mxu0 0
      %496 = vmatmul.mubr.bf16.gmra.mrb[0].mxu0 %v421
      %v497 = vpop.f32.mrb[0].mxu0
      %v498 = vadd.f32 0.0, %v497
      %v499 = vpop.f32.mrb[0].mxu0
      %v500 = vpop.f32.mrb[0].mxu0
      %v501 = vadd.f32 0.0, %v500
      %v502 = vpop.f32.mrb[0].mxu0
      %503 = vmatprep.mubr.bf16.mxu0 0
      %504 = vmatmul.mubr.bf16.gmra.mrb[0].mxu0 %v424
      %v505 = vpop.f32.mrb[0].mxu0
      %v506 = vadd.f32 0.0, %v505
      %v507 = vpop.f32.mrb[0].mxu0
      %v508 = vpop.f32.mrb[0].mxu0
      %v509 = vadd.f32 0.0, %v508
      %v510 = vpop.f32.mrb[0].mxu0
      %511 = vmatprep.mubr.bf16.mxu0 0
      %512 = vmatmul.mubr.bf16.gmra.mrb[0].mxu0 %v427
      %v513 = vpop.f32.mrb[0].mxu0
      %v514 = vadd.f32 0.0, %v513
      %v515 = vpop.f32.mrb[0].mxu0
      %v516 = vpop.f32.mrb[0].mxu0
      %v517 = vadd.f32 0.0, %v516
      %v518 = vpop.f32.mrb[0].mxu0
      %519 = vmatprep.mubr.bf16.mxu0 0
      %520 = vmatmul.mubr.bf16.gmra.mrb[0].mxu0 %v430
      %v521 = vpop.f32.mrb[0].mxu0
      %v522 = vadd.f32 0.0, %v521
      %v523 = vpop.f32.mrb[0].mxu0
      %v524 = vpop.f32.mrb[0].mxu0
      %v525 = vadd.f32 0.0, %v524
      %v526 = vpop.f32.mrb[0].mxu0
      %527 = vmatprep.mubr.bf16.mxu0 0
      %528 = vmatmul.mubr.bf16.gmra.mrb[0].mxu0 %v433
      %v529 = vpop.f32.mrb[0].mxu0
      %v530 = vadd.f32 0.0, %v529
      %v531 = vpop.f32.mrb[0].mxu0
      %v532 = vpop.f32.mrb[0].mxu0
      %v533 = vadd.f32 0.0, %v532
      %v534 = vpop.f32.mrb[0].mxu0
      %535 = vdwg.mxu0
      %v538 = vunpack.c.l.b16 %v407
      %v539 = vunpack.c.l.b16 %v408
      %v540 = vpack.c.b16 %v539, %v538
      %vm542 = vcmask 130048
      %v544 = vsel %vm542, %v375, 0
      %v547 = vsel %vm542, %v376, 0
      %v550 = vsel %vm542, %v377, 0
      %v553 = vsel %vm542, %v378, 0
      %v556 = vsel %vm542, %v379, 0
      %v559 = vsel %vm542, %v380, 0
      %v562 = vsel %vm542, %v381, 0
      %v565 = vsel %vm542, %v382, 0
      %567 = vmatprep.subr.bf16.mxu0 0
      %568 = vmatpush1.bf16.msra.mxu0 %v540
      %569 = vmatprep.subr.bf16.mxu0 0
      %570 = vmatpush1.bf16.msra.mxu0 0
      %571 = vmatprep.subr.bf16.mxu0 0
      %572 = vmatpush1.bf16.msra.mxu0 0
      %573 = vmatprep.subr.bf16.mxu0 0
      %574 = vmatpush1.bf16.msra.mxu0 0
      %575 = vmatprep.subr.bf16.mxu0 0
      %576 = vmatpush1.bf16.msra.mxu0 0
      %577 = vmatprep.subr.bf16.mxu0 0
      %578 = vmatpush1.bf16.msra.mxu0 0
      %579 = vmatprep.subr.bf16.mxu0 0
      %580 = vmatpush1.bf16.msra.mxu0 0
      %581 = vmatprep.subr.bf16.mxu0 0
      %582 = vmatpush1.bf16.msra.mxu0 0
      %583 = vmatprep.subr.bf16.mxu0 0
      %584 = vmatpush1.bf16.msra.mxu0 0
      %585 = vmatprep.subr.bf16.mxu0 0
      %586 = vmatpush1.bf16.msra.mxu0 0
      %587 = vmatprep.subr.bf16.mxu0 0
      %588 = vmatpush1.bf16.msra.mxu0 0
      %589 = vmatprep.subr.bf16.mxu0 0
      %590 = vmatpush1.bf16.msra.mxu0 0
      %591 = vmatprep.subr.bf16.mxu0 0
      %592 = vmatpush1.bf16.msra.mxu0 0
      %593 = vmatprep.subr.bf16.mxu0 0
      %594 = vmatpush1.bf16.msra.mxu0 0
      %595 = vmatprep.subr.bf16.mxu0 0
      %596 = vmatpush1.bf16.msra.mxu0 0
      %597 = vmatprep.subr.bf16.mxu0 0
      %598 = vmatpush1.bf16.msra.mxu0 0
      %599 = vmatprep.mubr.bf16.mxu0 0
      %600 = vmatmul.mubr.bf16.gmra.mrb[0].mxu0 %v544
      %v601 = vpop.f32.mrb[0].mxu0
      %v602 = vadd.f32 %v474, %v601
      %v603 = vpop.f32.mrb[0].mxu0
      %v604 = vpop.f32.mrb[0].mxu0
      %v605 = vadd.f32 %v477, %v604
      %v606 = vpop.f32.mrb[0].mxu0
      %607 = vmatprep.mubr.bf16.mxu0 0
      %608 = vmatmul.mubr.bf16.gmra.mrb[0].mxu0 %v547
      %v609 = vpop.f32.mrb[0].mxu0
      %v610 = vadd.f32 %v482, %v609
      %v611 = vpop.f32.mrb[0].mxu0
      %v612 = vpop.f32.mrb[0].mxu0
      %v613 = vadd.f32 %v485, %v612
      %v614 = vpop.f32.mrb[0].mxu0
      %615 = vmatprep.mubr.bf16.mxu0 0
      %616 = vmatmul.mubr.bf16.gmra.mrb[0].mxu0 %v550
      %v617 = vpop.f32.mrb[0].mxu0
      %v618 = vadd.f32 %v490, %v617
      %v619 = vpop.f32.mrb[0].mxu0
      %v620 = vpop.f32.mrb[0].mxu0
      %v621 = vadd.f32 %v493, %v620
      %v622 = vpop.f32.mrb[0].mxu0
      %623 = vmatprep.mubr.bf16.mxu0 0
      %624 = vmatmul.mubr.bf16.gmra.mrb[0].mxu0 %v553
      %v625 = vpop.f32.mrb[0].mxu0
      %v626 = vadd.f32 %v498, %v625
      %v627 = vpop.f32.mrb[0].mxu0
      %v628 = vpop.f32.mrb[0].mxu0
      %v629 = vadd.f32 %v501, %v628
      %v630 = vpop.f32.mrb[0].mxu0
      %631 = vmatprep.mubr.bf16.mxu0 0
      %632 = vmatmul.mubr.bf16.gmra.mrb[0].mxu0 %v556
      %v633 = vpop.f32.mrb[0].mxu0
      %v634 = vadd.f32 %v506, %v633
      %v635 = vpop.f32.mrb[0].mxu0
      %v636 = vpop.f32.mrb[0].mxu0
      %v637 = vadd.f32 %v509, %v636
      %v638 = vpop.f32.mrb[0].mxu0
      %639 = vmatprep.mubr.bf16.mxu0 0
      %640 = vmatmul.mubr.bf16.gmra.mrb[0].mxu0 %v559
      %v641 = vpop.f32.mrb[0].mxu0
      %v642 = vadd.f32 %v514, %v641
      %v643 = vpop.f32.mrb[0].mxu0
      %v644 = vpop.f32.mrb[0].mxu0
      %v645 = vadd.f32 %v517, %v644
      %v646 = vpop.f32.mrb[0].mxu0
      %647 = vmatprep.mubr.bf16.mxu0 0
      %648 = vmatmul.mubr.bf16.gmra.mrb[0].mxu0 %v562
      %v649 = vpop.f32.mrb[0].mxu0
      %v650 = vadd.f32 %v522, %v649
      %v651 = vpop.f32.mrb[0].mxu0
      %v652 = vpop.f32.mrb[0].mxu0
      %v653 = vadd.f32 %v525, %v652
      %v654 = vpop.f32.mrb[0].mxu0
      %655 = vmatprep.mubr.bf16.mxu0 0
      %656 = vmatmul.mubr.bf16.gmra.mrb[0].mxu0 %v565
      %v657 = vpop.f32.mrb[0].mxu0
      %v658 = vadd.f32 %v530, %v657
      %v659 = vpop.f32.mrb[0].mxu0
      %v660 = vpop.f32.mrb[0].mxu0
      %v661 = vadd.f32 %v533, %v660
      %v662 = vpop.f32.mrb[0].mxu0
      %663 = vdwg.mxu0
      %v664 = vld [vmem:[%s4] sm:$0x1]
      %v666 = vlaneseq
      %v667 = vshrl.u32 %v666, 7
      %v668 = vsub.s32 0, %v667
      %v669 = vrot.slane %v664, %v668
      %v671 = vadd.f32 %v602, %v669
      %v672 = vadd.f32 %v605, %v669
      %v673 = vadd.f32 %v610, %v669
      %v674 = vadd.f32 %v613, %v669
      %v675 = vadd.f32 %v618, %v669
      %v676 = vadd.f32 %v621, %v669
      %v677 = vadd.f32 %v626, %v669
      %v678 = vadd.f32 %v629, %v669
      %v679 = vadd.f32 %v634, %v669
      %v680 = vadd.f32 %v637, %v669
      %v681 = vadd.f32 %v642, %v669
      %v682 = vadd.f32 %v645, %v669
      %v683 = vadd.f32 %v650, %v669
      %v684 = vadd.f32 %v653, %v669
      %v685 = vadd.f32 %v658, %v669
      %v686 = vadd.f32 %v661, %v669
      %v687 = vmax.f32 %v671, 0.0
      %v688 = vmax.f32 %v672, 0.0
      %v689 = vmax.f32 %v673, 0.0
      %v690 = vmax.f32 %v674, 0.0
      %v691 = vmax.f32 %v675, 0.0
      %v692 = vmax.f32 %v676, 0.0
      %v693 = vmax.f32 %v677, 0.0
      %v694 = vmax.f32 %v678, 0.0
      %v695 = vmax.f32 %v679, 0.0
      %v696 = vmax.f32 %v680, 0.0
      %v697 = vmax.f32 %v681, 0.0
      %v698 = vmax.f32 %v682, 0.0
      %v699 = vmax.f32 %v683, 0.0
      %v700 = vmax.f32 %v684, 0.0
      %v701 = vmax.f32 %v685, 0.0
      %v702 = vmax.f32 %v686, 0.0
      %v703 = vpack.c.bf16 %v688, %v687
      %v704 = vpack.c.bf16 %v690, %v689
      %v705 = vpack.c.bf16 %v692, %v691
      %v706 = vpack.c.bf16 %v694, %v693
      %v707 = vpack.c.bf16 %v696, %v695
      %v708 = vpack.c.bf16 %v698, %v697
      %v709 = vpack.c.bf16 %v700, %v699
      %v710 = vpack.c.bf16 %v702, %v701
      %v711 = vld [vmem:[%s5] sm:$0xf]
      %v712 = vld [vmem:[%s5 + $0x4] sm:$0xf]
      %v713 = vld [vmem:[%s5 + $0x8] sm:$0xf]
      %v714 = vld [vmem:[%s5 + $0xc] sm:$0xf]
      %v715 = vld [vmem:[%s5 + $0x10] sm:$0xf]
      %v716 = vld [vmem:[%s5 + $0x14] sm:$0xf]
      %v717 = vld [vmem:[%s5 + $0x18] sm:$0xf]
      %v718 = vld [vmem:[%s5 + $0x1c] sm:$0xf]
      %v719 = vld [vmem:[%s6] sm:$0x1]
      %v721 = vlaneseq
      %v722 = vshrl.u32 %v721, 7
      %v723 = vsub.s32 0, %v722
      %v724 = vrot.slane %v719, %v723
      %v734 = vunpack.c.l.b16 %v711
      %v735 = vunpack.c.l.b16 %v712
      %v736 = vunpack.c.l.b16 %v713
      %v737 = vunpack.c.l.b16 %v714
      %v738 = vunpack.c.l.b16 %v715
      %v739 = vunpack.c.l.b16 %v716
      %v740 = vunpack.c.l.b16 %v717
      %v741 = vunpack.c.l.b16 %v718
      %v742 = vpack.c.b16 %v735, %v734
      %v743 = vpack.c.b16 %v737, %v736
      %v744 = vpack.c.b16 %v739, %v738
      %v745 = vpack.c.b16 %v741, %v740
      %vm750 = vcmask 523264
      %v752 = vsel %vm750, %v703, 0
      %v755 = vsel %vm750, %v704, 0
      %v758 = vsel %vm750, %v705, 0
      %v761 = vsel %vm750, %v706, 0
      %v764 = vsel %vm750, %v707, 0
      %v767 = vsel %vm750, %v708, 0
      %v770 = vsel %vm750, %v709, 0
      %v773 = vsel %vm750, %v710, 0
      %775 = vmatprep.subr.bf16.mxu0 0
      %776 = vmatpush1.bf16.msra.mxu0 %v742
      %777 = vmatprep.subr.bf16.mxu0 0
      %778 = vmatpush1.bf16.msra.mxu0 %v743
      %779 = vmatprep.subr.bf16.mxu0 0
      %780 = vmatpush1.bf16.msra.mxu0 %v744
      %781 = vmatprep.subr.bf16.mxu0 0
      %782 = vmatpush1.bf16.msra.mxu0 %v745
      %783 = vmatprep.subr.bf16.mxu0 0
      %784 = vmatpush1.bf16.msra.mxu0 0
      %785 = vmatprep.subr.bf16.mxu0 0
      %786 = vmatpush1.bf16.msra.mxu0 0
      %787 = vmatprep.subr.bf16.mxu0 0
      %788 = vmatpush1.bf16.msra.mxu0 0
      %789 = vmatprep.subr.bf16.mxu0 0
      %790 = vmatpush1.bf16.msra.mxu0 0
      %791 = vmatprep.subr.bf16.mxu0 0
      %792 = vmatpush1.bf16.msra.mxu0 0
      %793 = vmatprep.subr.bf16.mxu0 0
      %794 = vmatpush1.bf16.msra.mxu0 0
      %795 = vmatprep.subr.bf16.mxu0 0
      %796 = vmatpush1.bf16.msra.mxu0 0
      %797 = vmatprep.subr.bf16.mxu0 0
      %798 = vmatpush1.bf16.msra.mxu0 0
      %799 = vmatprep.subr.bf16.mxu0 0
      %800 = vmatpush1.bf16.msra.mxu0 0
      %801 = vmatprep.subr.bf16.mxu0 0
      %802 = vmatpush1.bf16.msra.mxu0 0
      %803 = vmatprep.subr.bf16.mxu0 0
      %804 = vmatpush1.bf16.msra.mxu0 0
      %805 = vmatprep.subr.bf16.mxu0 0
      %806 = vmatpush1.bf16.msra.mxu0 0
      %807 = vmatprep.mubr.bf16.mxu0 0
      %808 = vmatmul.mubr.bf16.gmra.mrb[0].mxu0 %v752
      %v809 = vpop.f32.mrb[0].mxu0
      %v810 = vadd.f32 %v724, %v809
      %v811 = vpop.f32.mrb[0].mxu0
      %v812 = vpop.f32.mrb[0].mxu0
      %v813 = vadd.f32 %v724, %v812
      %v814 = vpop.f32.mrb[0].mxu0
      %815 = vmatprep.mubr.bf16.mxu0 0
      %816 = vmatmul.mubr.bf16.gmra.mrb[0].mxu0 %v755
      %v817 = vpop.f32.mrb[0].mxu0
      %v818 = vadd.f32 %v724, %v817
      %v819 = vpop.f32.mrb[0].mxu0
      %v820 = vpop.f32.mrb[0].mxu0
      %v821 = vadd.f32 %v724, %v820
      %v822 = vpop.f32.mrb[0].mxu0
      %823 = vmatprep.mubr.bf16.mxu0 0
      %824 = vmatmul.mubr.bf16.gmra.mrb[0].mxu0 %v758
      %v825 = vpop.f32.mrb[0].mxu0
      %v826 = vadd.f32 %v724, %v825
      %v827 = vpop.f32.mrb[0].mxu0
      %v828 = vpop.f32.mrb[0].mxu0
      %v829 = vadd.f32 %v724, %v828
      %v830 = vpop.f32.mrb[0].mxu0
      %831 = vmatprep.mubr.bf16.mxu0 0
      %832 = vmatmul.mubr.bf16.gmra.mrb[0].mxu0 %v761
      %v833 = vpop.f32.mrb[0].mxu0
      %v834 = vadd.f32 %v724, %v833
      %v835 = vpop.f32.mrb[0].mxu0
      %v836 = vpop.f32.mrb[0].mxu0
      %v837 = vadd.f32 %v724, %v836
      %v838 = vpop.f32.mrb[0].mxu0
      %839 = vmatprep.mubr.bf16.mxu0 0
      %840 = vmatmul.mubr.bf16.gmra.mrb[0].mxu0 %v764
      %v841 = vpop.f32.mrb[0].mxu0
      %v842 = vadd.f32 %v724, %v841
      %v843 = vpop.f32.mrb[0].mxu0
      %v844 = vpop.f32.mrb[0].mxu0
      %v845 = vadd.f32 %v724, %v844
      %v846 = vpop.f32.mrb[0].mxu0
      %847 = vmatprep.mubr.bf16.mxu0 0
      %848 = vmatmul.mubr.bf16.gmra.mrb[0].mxu0 %v767
      %v849 = vpop.f32.mrb[0].mxu0
      %v850 = vadd.f32 %v724, %v849
      %v851 = vpop.f32.mrb[0].mxu0
      %v852 = vpop.f32.mrb[0].mxu0
      %v853 = vadd.f32 %v724, %v852
      %v854 = vpop.f32.mrb[0].mxu0
      %855 = vmatprep.mubr.bf16.mxu0 0
      %856 = vmatmul.mubr.bf16.gmra.mrb[0].mxu0 %v770
      %v857 = vpop.f32.mrb[0].mxu0
      %v858 = vadd.f32 %v724, %v857
      %v859 = vpop.f32.mrb[0].mxu0
      %v860 = vpop.f32.mrb[0].mxu0
      %v861 = vadd.f32 %v724, %v860
      %v862 = vpop.f32.mrb[0].mxu0
      %863 = vmatprep.mubr.bf16.mxu0 0
      %864 = vmatmul.mubr.bf16.gmra.mrb[0].mxu0 %v773
      %v865 = vpop.f32.mrb[0].mxu0
      %v866 = vadd.f32 %v724, %v865
      %v867 = vpop.f32.mrb[0].mxu0
      %v868 = vpop.f32.mrb[0].mxu0
      %v869 = vadd.f32 %v724, %v868
      %v870 = vpop.f32.mrb[0].mxu0
      %871 = vdwg.mxu0
      %v872 = vmax.f32 %v810, 0.0
      %v873 = vmax.f32 %v813, 0.0
      %v874 = vmax.f32 %v818, 0.0
      %v875 = vmax.f32 %v821, 0.0
      %v876 = vmax.f32 %v826, 0.0
      %v877 = vmax.f32 %v829, 0.0
      %v878 = vmax.f32 %v834, 0.0
      %v879 = vmax.f32 %v837, 0.0
      %v880 = vmax.f32 %v842, 0.0
      %v881 = vmax.f32 %v845, 0.0
      %v882 = vmax.f32 %v850, 0.0
      %v883 = vmax.f32 %v853, 0.0
      %v884 = vmax.f32 %v858, 0.0
      %v885 = vmax.f32 %v861, 0.0
      %v886 = vmax.f32 %v866, 0.0
      %v887 = vmax.f32 %v869, 0.0
      %v888 = vpack.c.bf16 %v873, %v872
      %v889 = vpack.c.bf16 %v875, %v874
      %v890 = vpack.c.bf16 %v877, %v876
      %v891 = vpack.c.bf16 %v879, %v878
      %v892 = vpack.c.bf16 %v881, %v880
      %v893 = vpack.c.bf16 %v883, %v882
      %v894 = vpack.c.bf16 %v885, %v884
      %v895 = vpack.c.bf16 %v887, %v886
      %v896 = vld [vmem:[%s7] sm:$0xf]
      %v897 = vld [vmem:[%s7 + $0x4] sm:$0xf]
      %v898 = vld [vmem:[%s7 + $0x8] sm:$0xf]
      %v899 = vld [vmem:[%s7 + $0xc] sm:$0xf]
      %v900 = vld [vmem:[%s7 + $0x10] sm:$0xf]
      %v901 = vld [vmem:[%s7 + $0x14] sm:$0xf]
      %v902 = vld [vmem:[%s7 + $0x18] sm:$0xf]
      %v903 = vld [vmem:[%s7 + $0x1c] sm:$0xf]
      %v904 = vld [vmem:[%s8] sm:$0x1]
      %v906 = vlaneseq
      %v907 = vshrl.u32 %v906, 7
      %v908 = vsub.s32 0, %v907
      %v909 = vrot.slane %v904, %v908
      %v919 = vunpack.c.l.b16 %v896
      %v920 = vunpack.c.l.b16 %v897
      %v921 = vunpack.c.l.b16 %v898
      %v922 = vunpack.c.l.b16 %v899
      %v923 = vunpack.c.l.b16 %v900
      %v924 = vunpack.c.l.b16 %v901
      %v925 = vunpack.c.l.b16 %v902
      %v926 = vunpack.c.l.b16 %v903
      %v927 = vpack.c.b16 %v920, %v919
      %v928 = vpack.c.b16 %v922, %v921
      %v929 = vpack.c.b16 %v924, %v923
      %v930 = vpack.c.b16 %v926, %v925
      %v936 = vsel %vm750, %v888, 0
      %v939 = vsel %vm750, %v889, 0
      %v942 = vsel %vm750, %v890, 0
      %v945 = vsel %vm750, %v891, 0
      %v948 = vsel %vm750, %v892, 0
      %v951 = vsel %vm750, %v893, 0
      %v954 = vsel %vm750, %v894, 0
      %v957 = vsel %vm750, %v895, 0
      %959 = vmatprep.subr.bf16.mxu0 0
      %960 = vmatpush1.bf16.msra.mxu0 %v927
      %961 = vmatprep.subr.bf16.mxu0 0
      %962 = vmatpush1.bf16.msra.mxu0 %v928
      %963 = vmatprep.subr.bf16.mxu0 0
      %964 = vmatpush1.bf16.msra.mxu0 %v929
      %965 = vmatprep.subr.bf16.mxu0 0
      %966 = vmatpush1.bf16.msra.mxu0 %v930
      %967 = vmatprep.subr.bf16.mxu0 0
      %968 = vmatpush1.bf16.msra.mxu0 0
      %969 = vmatprep.subr.bf16.mxu0 0
      %970 = vmatpush1.bf16.msra.mxu0 0
      %971 = vmatprep.subr.bf16.mxu0 0
      %972 = vmatpush1.bf16.msra.mxu0 0
      %973 = vmatprep.subr.bf16.mxu0 0
      %974 = vmatpush1.bf16.msra.mxu0 0
      %975 = vmatprep.subr.bf16.mxu0 0
      %976 = vmatpush1.bf16.msra.mxu0 0
      %977 = vmatprep.subr.bf16.mxu0 0
      %978 = vmatpush1.bf16.msra.mxu0 0
      %979 = vmatprep.subr.bf16.mxu0 0
      %980 = vmatpush1.bf16.msra.mxu0 0
      %981 = vmatprep.subr.bf16.mxu0 0
      %982 = vmatpush1.bf16.msra.mxu0 0
      %983 = vmatprep.subr.bf16.mxu0 0
      %984 = vmatpush1.bf16.msra.mxu0 0
      %985 = vmatprep.subr.bf16.mxu0 0
      %986 = vmatpush1.bf16.msra.mxu0 0
      %987 = vmatprep.subr.bf16.mxu0 0
      %988 = vmatpush1.bf16.msra.mxu0 0
      %989 = vmatprep.subr.bf16.mxu0 0
      %990 = vmatpush1.bf16.msra.mxu0 0
      %991 = vmatprep.mubr.bf16.mxu0 0
      %992 = vmatmul.mubr.bf16.gmra.mrb[0].mxu0 %v936
      %v993 = vpop.f32.mrb[0].mxu0
      %v994 = vadd.f32 %v909, %v993
      %v995 = vpop.f32.mrb[0].mxu0
      %v996 = vpop.f32.mrb[0].mxu0
      %v997 = vadd.f32 %v909, %v996
      %v998 = vpop.f32.mrb[0].mxu0
      %999 = vmatprep.mubr.bf16.mxu0 0
      %1000 = vmatmul.mubr.bf16.gmra.mrb[0].mxu0 %v939
      %v1001 = vpop.f32.mrb[0].mxu0
      %v1002 = vadd.f32 %v909, %v1001
      %v1003 = vpop.f32.mrb[0].mxu0
      %v1004 = vpop.f32.mrb[0].mxu0
      %v1005 = vadd.f32 %v909, %v1004
      %v1006 = vpop.f32.mrb[0].mxu0
      %1007 = vmatprep.mubr.bf16.mxu0 0
      %1008 = vmatmul.mubr.bf16.gmra.mrb[0].mxu0 %v942
      %v1009 = vpop.f32.mrb[0].mxu0
      %v1010 = vadd.f32 %v909, %v1009
      %v1011 = vpop.f32.mrb[0].mxu0
      %v1012 = vpop.f32.mrb[0].mxu0
      %v1013 = vadd.f32 %v909, %v1012
      %v1014 = vpop.f32.mrb[0].mxu0
      %1015 = vmatprep.mubr.bf16.mxu0 0
      %1016 = vmatmul.mubr.bf16.gmra.mrb[0].mxu0 %v945
      %v1017 = vpop.f32.mrb[0].mxu0
      %v1018 = vadd.f32 %v909, %v1017
      %v1019 = vpop.f32.mrb[0].mxu0
      %v1020 = vpop.f32.mrb[0].mxu0
      %v1021 = vadd.f32 %v909, %v1020
      %v1022 = vpop.f32.mrb[0].mxu0
      %1023 = vmatprep.mubr.bf16.mxu0 0
      %1024 = vmatmul.mubr.bf16.gmra.mrb[0].mxu0 %v948
      %v1025 = vpop.f32.mrb[0].mxu0
      %v1026 = vadd.f32 %v909, %v1025
      %v1027 = vpop.f32.mrb[0].mxu0
      %v1028 = vpop.f32.mrb[0].mxu0
      %v1029 = vadd.f32 %v909, %v1028
      %v1030 = vpop.f32.mrb[0].mxu0
      %1031 = vmatprep.mubr.bf16.mxu0 0
      %1032 = vmatmul.mubr.bf16.gmra.mrb[0].mxu0 %v951
      %v1033 = vpop.f32.mrb[0].mxu0
      %v1034 = vadd.f32 %v909, %v1033
      %v1035 = vpop.f32.mrb[0].mxu0
      %v1036 = vpop.f32.mrb[0].mxu0
      %v1037 = vadd.f32 %v909, %v1036
      %v1038 = vpop.f32.mrb[0].mxu0
      %1039 = vmatprep.mubr.bf16.mxu0 0
      %1040 = vmatmul.mubr.bf16.gmra.mrb[0].mxu0 %v954
      %v1041 = vpop.f32.mrb[0].mxu0
      %v1042 = vadd.f32 %v909, %v1041
      %v1043 = vpop.f32.mrb[0].mxu0
      %v1044 = vpop.f32.mrb[0].mxu0
      %v1045 = vadd.f32 %v909, %v1044
      %v1046 = vpop.f32.mrb[0].mxu0
      %1047 = vmatprep.mubr.bf16.mxu0 0
      %1048 = vmatmul.mubr.bf16.gmra.mrb[0].mxu0 %v957
      %v1049 = vpop.f32.mrb[0].mxu0
      %v1050 = vadd.f32 %v909, %v1049
      %v1051 = vpop.f32.mrb[0].mxu0
      %v1052 = vpop.f32.mrb[0].mxu0
      %v1053 = vadd.f32 %v909, %v1052
      %v1054 = vpop.f32.mrb[0].mxu0
      %1055 = vdwg.mxu0
      %vm1056 = vcmask 15360
      %1057 = vst.msk [vmem:[%s356] sm:$0xff] %vm1056, %v994
      %1058 = vst.msk [vmem:[%s356 + $0x8] sm:$0xff] %vm1056, %v997
      %1059 = vst.msk [vmem:[%s356 + $0x10] sm:$0xff] %vm1056, %v1002
      %1060 = vst.msk [vmem:[%s356 + $0x18] sm:$0xff] %vm1056, %v1005
      %1061 = vst.msk [vmem:[%s356 + $0x20] sm:$0xff] %vm1056, %v1010
      %1062 = vst.msk [vmem:[%s356 + $0x28] sm:$0xff] %vm1056, %v1013
      %1063 = vst.msk [vmem:[%s356 + $0x30] sm:$0xff] %vm1056, %v1018
      %1064 = vst.msk [vmem:[%s356 + $0x38] sm:$0xff] %vm1056, %v1021
      %1065 = vst.msk [vmem:[%s356 + $0x40] sm:$0xff] %vm1056, %v1026
      %1066 = vst.msk [vmem:[%s356 + $0x48] sm:$0xff] %vm1056, %v1029
      %1067 = vst.msk [vmem:[%s356 + $0x50] sm:$0xff] %vm1056, %v1034
      %1068 = vst.msk [vmem:[%s356 + $0x58] sm:$0xff] %vm1056, %v1037
      %1069 = vst.msk [vmem:[%s356 + $0x60] sm:$0xff] %vm1056, %v1042
      %1070 = vst.msk [vmem:[%s356 + $0x68] sm:$0xff] %vm1056, %v1045
      %1071 = vst.msk [vmem:[%s356 + $0x70] sm:$0xff] %vm1056, %v1050
      %1072 = vst.msk [vmem:[%s356 + $0x78] sm:$0xff] %vm1056, %v1053
      %s1073 = smul.u32 16, %s20
      %p1074 = scmp.lt.s32.totalorder %s1073, 31
      %s1075 = scalar_select %p1074, %s1073, 31
      %s1076 = smul.addr %s1075, 8
      %s1077 = scalar_lea.vmem %s9, %s1076
      // Predicated region
      $region57: #{tpu_custom_call.1} parent=55 // pred_check
        %p1078 = pneg %p237
      $region58: #{tpu_custom_call.1} parent=55 // pred_check_branch
        %1080 = sbr.rel (%p1078) target = $region60
      $region59: #{tpu_custom_call.1} parent=55 // pred_region
        %s1081 = smul.u32 16, %s20
      $region60: #{tpu_custom_call.1} parent=55 // pred_fallthru
        _
    $region56: #{tpu_custom_call.1} parent=5 // pred_fallthru
      _
    %p1082 = scmp.le.s32.totalorder 2, %s15
    // Predicated region
    $region61: #{tpu_custom_call.1} parent=5 // pred_check
      %p1083 = pneg %p1082
    $region62: #{tpu_custom_call.1} parent=5 // pred_check_branch
      %1085 = sbr.rel (%p1083) target = $region64
    $region63: #{tpu_custom_call.1} parent=5 // pred_region
      %s1086 = ssub.s32 %s15, 2
      // Predicated region
      $region65: #{tpu_custom_call.1} parent=63 // pred_check
        %p1087 = pneg %p243
      $region66: #{tpu_custom_call.1} parent=63 // pred_check_branch
        %1089 = sbr.rel (%p1087) target = $region68
      $region67: #{tpu_custom_call.1} parent=63 // pred_region
        %s1090 = smul.u32 16, %s21
        %p1091 = scmp.lt.s32.totalorder %s1090, 31
        %s1092 = scalar_select %p1091, %s1090, 31
        %s1093 = smul.addr %s1092, 8
        %s1094 = scalar_lea.vmem %s9, %s1093
      $region68: #{tpu_custom_call.1} parent=63 // pred_fallthru
        _
    $region64: #{tpu_custom_call.1} parent=5 // pred_fallthru
      _
  $region6: #{tpu_custom_call.1} parent=0 // loop_footer
    %s19 = sadd.s32 1, %s15
  $region7: #{tpu_custom_call.1} parent=0 // loop_footer_branch
    %14 = sbr.rel target = $region3
  $region8: #{tpu_custom_call.1} parent=0 // loop_exit
    _

</llo_original>
